<compile_context>
chip_gen: v5e
topology: v5e:2x2
jax: 0.10.0
libtpu: 0.0.40
codegen_flags: <defaults>
</compile_context>

<pallas_src>
import functools

import jax
import jax.numpy as jnp
from jax.experimental import pallas as pl
from jax.experimental.pallas import tpu as pltpu


def _pick_tile_rows(k_total, c, itemsize, target_block_bytes=2 << 20):
    """Sublane-rows (of 128 pixels) per tile so one logits block ~= target bytes."""
    rows = target_block_bytes // max(1, c * 128 * itemsize)
    rows = max(16, (rows // 16) * 16)     # multiple of 16 keeps bf16 packing dense
    if rows >= k_total:
        return k_total                    # full dim is always a legal block extent
    return rows


def _focal_loss_kernel(x_ref, t_ref, out_ref, *, gamma, hw, blocks_per_split, alpha):
    pi = pl.program_id(1)
    j = pl.program_id(2)

    # Output block is the accumulator: resident across the innermost
    # ("arbitrary") pixel-tile axis.
    @pl.when(j == 0)
    def _():
        out_ref[...] = jnp.zeros_like(out_ref)

    x = x_ref[...].astype(jnp.float32)   # (1, C, TK, 128): rows on sublanes, pixels on lanes
    t = t_ref[...]                       # (1, 1, TK, 128) int32 class indices
    c = x.shape[1]
    tk = x.shape[2]

    # Numerically stable log-softmax over the class axis.  C is a leading
    # (non-vreg) dim, so max/sum are plane-wise VPU ops on dense vregs.
    m = jnp.max(x, axis=1, keepdims=True)                        # (1, 1, TK, 128)
    z = x - m
    sumexp = jnp.sum(jnp.exp(z), axis=1, keepdims=True)
    lse = jnp.log(sumexp)

    # gather(1, target) (and the per-class alpha weight) via per-class selects.
    zt = jnp.zeros_like(lse)
    at = None if alpha is None else jnp.zeros_like(lse)
    for ci in range(c):
        sel = t == ci
        zt = zt + jnp.where(sel, z[:, ci:ci + 1], 0.0)
        if alpha is not None:
            a_ci = float(alpha[ci]) if ci < len(alpha) else 1.0
            at = at + jnp.where(sel, a_ci, 0.0)

    logpt = zt - lse                                             # (1, 1, TK, 128)
    pt = jnp.exp(logpt)
    # exp rounding can push pt slightly above 1 -> clamp so pow never sees a
    # negative base.
    ompt = jnp.maximum(1.0 - pt, 0.0)

    g = float(gamma)
    if g == 0.0:
        focal = jnp.ones_like(ompt)
    elif g.is_integer() and 1.0 <= g <= 8.0:
        # Integer gamma (default 2): gamma-1 VPU multiplies, no EUP pow.
        focal = ompt
        for _ in range(int(g) - 1):
            focal = focal * ompt
    else:
        focal = ompt ** g

    if alpha is not None:
        # Matches the PyTorch module: pt is taken from the *unweighted* logpt.
        logpt = logpt * at

    loss = -focal * logpt                                        # (1, 1, TK, 128)

    # Only tiles touching the ragged tail (or overhanging a short parallel
    # split) pay for iota/compare/select; all others do a plain accumulate.
    gb = pi * blocks_per_split + j          # global pixel-row block index
    block_start = gb * tk * 128
    is_full = block_start + tk * 128 <= hw

    @pl.when(is_full)
    def _():
        out_ref[...] += loss

    @pl.when(jnp.logical_not(is_full))
    def _():
        r = jax.lax.broadcasted_iota(jnp.int32, loss.shape, 2)
        l = jax.lax.broadcasted_iota(jnp.int32, loss.shape, 3)
        valid = (block_start + r * 128 + l) < hw
        out_ref[...] += jnp.where(valid, loss, 0.0)


def focal_loss2(logits_nchw, target_nhw, gamma=2.0, alpha=None, size_average=True,
                tile_rows=None):
    """Matches FocalLoss2(gamma, alpha, size_average).forward(logits, target)."""
    n, c, h, w = logits_nchw.shape
    hw = h * w
    m_rows = n * hw

    k_pad = pl.cdiv(hw, 128)
    hw_pad = k_pad * 128

    # Free views of the contiguous pixel axis (no HBM transpose).
    x = logits_nchw.reshape(n, c, hw)
    t = target_nhw.reshape(n, 1, hw).astype(jnp.int32)
    if hw_pad != hw:
        # TODO(synk): ragged H*W pads the pixel axis in HBM (one extra copy of
        # the logits stream); padded pixels are masked out inside the kernel.
        x = jnp.pad(x, ((0, 0), (0, 0), (0, hw_pad - hw)))
        t = jnp.pad(t, ((0, 0), (0, 0), (0, hw_pad - hw)))
    # 128 pixels per sublane-row -> fully dense (sublane, lane) vregs at small C.
    x = x.reshape(n, c, k_pad, 128)
    t = t.reshape(n, 1, k_pad, 128)

    itemsize = jnp.dtype(logits_nchw.dtype).itemsize
    if tile_rows is None:
        tk = _pick_tile_rows(k_pad, c, itemsize)
    else:
        tk = min(int(tile_rows), k_pad)
    if tk < k_pad:
        tk = max(8, (tk // 8) * 8)          # respect the (8, 128) block constraint

    jb = pl.cdiv(k_pad, tk)                 # total pixel-row blocks
    # Make sure both TensorCores (v7x megacore) get parallel grid work even for
    # N == 1 / odd N by splitting the pixel-block axis.
    p = 1 if (n >= 2 and n % 2 == 0) else 2
    p = min(p, jb)
    j_per = pl.cdiv(jb, p)

    # Clamp the row-block index so an overhanging split never DMAs past the
    # array; its contribution is masked to zero inside the kernel.
    def _row_block(pi, j):
        return jnp.minimum(pi * j_per + j, jb - 1)

    # alpha handling mirrors the PyTorch module constructor.
    if alpha is None:
        alpha_vec = None
    elif isinstance(alpha, (float, int)):
        alpha_vec = (float(alpha), 1.0 - float(alpha))
    else:
        alpha_vec = tuple(float(a) for a in alpha)

    kernel = functools.partial(
        _focal_loss_kernel, gamma=float(gamma), hw=hw,
        blocks_per_split=j_per, alpha=alpha_vec)

    cost = pl.CostEstimate(
        flops=int(m_rows * (8 * c + 12)),
        transcendentals=int(m_rows * (c + 2)),
        bytes_accessed=int(x.size * itemsize + t.size * 4 + n * p * tk * 128 * 4),
    )

    partials = pl.pallas_call(
        kernel,
        out_shape=jax.ShapeDtypeStruct((n, p, tk, 128), jnp.float32),
        grid_spec=pltpu.PrefetchScalarGridSpec(
            num_scalar_prefetch=0,
            grid=(n, p, j_per),
            in_specs=[
                pl.BlockSpec((1, c, tk, 128),
                             lambda ni, pi, j: (ni, 0, _row_block(pi, j), 0)),
                pl.BlockSpec((1, 1, tk, 128),
                             lambda ni, pi, j: (ni, 0, _row_block(pi, j), 0)),
            ],
            out_specs=pl.BlockSpec((1, 1, tk, 128),
                                   lambda ni, pi, j: (ni, pi, 0, 0)),
        ),
        compiler_params=pltpu.CompilerParams(
            dimension_semantics=("parallel", "parallel", "arbitrary"),
        ),
        cost_estimate=cost,
    )(x, t)

    total = jnp.sum(partials, dtype=jnp.float32)
    if size_average:
        return total / jnp.float32(m_rows)
    return total


def _reference_focal_loss(logits_nchw, target_nhw, gamma=2.0, alpha=None,
                          size_average=True):
    n, c, h, w = logits_nchw.shape
    x = jnp.transpose(logits_nchw.reshape(n, c, h * w), (0, 2, 1)).reshape(-1, c)
    x = x.astype(jnp.float32)
    t = target_nhw.reshape(-1).astype(jnp.int32)
    logp = jax.nn.log_softmax(x, axis=1)
    logpt = jnp.take_along_axis(logp, t[:, None], axis=1)[:, 0]
    pt = jnp.exp(logpt)
    if alpha is not None:
        if isinstance(alpha, (float, int)):
            avec = jnp.array([alpha, 1.0 - alpha], jnp.float32)
        else:
            avec = jnp.array(alpha, jnp.float32)
        logpt = logpt * avec[t]
    loss = -((1.0 - pt) ** gamma) * logpt
    return jnp.mean(loss) if size_average else jnp.sum(loss)


if __name__ == "__main__":
    key = jax.random.PRNGKey(0)
    ks = jax.random.split(key, 8)

    # 1) Primary: shapes the module spec implies (N, C, H, W) = (2, 4, 16, 16).
    N, C, H, W = 2, 4, 16, 16
    logits = jax.random.normal(ks[0], (N, C, H, W), dtype=jnp.float32)
    target = jax.random.randint(ks[1], (N, H, W), 0, C, dtype=jnp.int32)
    out = jax.block_until_ready(focal_loss2(logits, target, gamma=2.0))
    ref = jax.block_until_ready(_reference_focal_loss(logits, target, gamma=2.0))
    assert jnp.allclose(out, ref, rtol=1e-5, atol=1e-5), (out, ref)

    # 2) N=1 forces the 2-way parallel pixel split; multi-tile reduction with an
    #    overhanging (clamped + masked) block; sum mode.
    logits2 = jax.random.normal(ks[2], (1, 4, 48, 64), dtype=jnp.float32)   # K=24, jb=3
    target2 = jax.random.randint(ks[3], (1, 48, 64), 0, 4, dtype=jnp.int32)
    out2 = jax.block_until_ready(
        focal_loss2(logits2, target2, gamma=2.0, size_average=False, tile_rows=8))
    ref2 = jax.block_until_ready(
        _reference_focal_loss(logits2, target2, gamma=2.0, size_average=False))
    assert jnp.allclose(out2, ref2, rtol=1e-5, atol=1e-3), (out2, ref2)

    # 3) Ragged H*W (225, not a multiple of 128) with C=3 -> padded + masked path.
    logits3 = jax.random.normal(ks[4], (2, 3, 15, 15), dtype=jnp.float32)
    target3 = jax.random.randint(ks[5], (2, 15, 15), 0, 3, dtype=jnp.int32)
    out3 = jax.block_until_ready(focal_loss2(logits3, target3, gamma=2.0))
    ref3 = jax.block_until_ready(_reference_focal_loss(logits3, target3, gamma=2.0))
    assert jnp.allclose(out3, ref3, rtol=1e-5, atol=1e-5), (out3, ref3)

    # 4) Partial last pixel-row block (tile does not divide K) + bf16 logits.
    logits4 = jax.random.normal(ks[6], (2, 4, 40, 64), dtype=jnp.bfloat16)  # K=20
    target4 = jax.random.randint(ks[7], (2, 40, 64), 0, 4, dtype=jnp.int32)
    out4 = jax.block_until_ready(
        focal_loss2(logits4, target4, gamma=2.0, tile_rows=16))
    ref4 = jax.block_until_ready(_reference_focal_loss(logits4, target4, gamma=2.0))
    assert jnp.allclose(out4, ref4, rtol=1e-3, atol=1e-3), (out4, ref4)

    # 5) alpha class-weighting + non-integer gamma path.
    alpha = [0.1, 0.2, 0.3, 0.4]
    out5 = jax.block_until_ready(
        focal_loss2(logits, target, gamma=1.5, alpha=alpha))
    ref5 = jax.block_until_ready(
        _reference_focal_loss(logits, target, gamma=1.5, alpha=alpha))
    assert jnp.allclose(out5, ref5, rtol=1e-5, atol=1e-5), (out5, ref5)

    print("KERNEL_OK")
</pallas_src>

<mosaic_0001>
module attributes {stable_mosaic.version = 11 : i64} {
  func.func @_focal_loss_kernel(%arg0: i32, %arg1: i32, %arg2: i32, %arg3: memref<1x4x2x128xf32, #tpu.memory_space<vmem>>, %arg4: memref<1x1x2x128xi32, #tpu.memory_space<vmem>>, %arg5: memref<1x1x2x128xf32, #tpu.memory_space<vmem>>) attributes {dimension_semantics = [#tpu.dimension_semantics<parallel>, #tpu.dimension_semantics<parallel>, #tpu.dimension_semantics<arbitrary>], iteration_bounds = array<i64: 2, 1, 1>, scalar_prefetch = 0 : i64, scratch_operands = 0 : i64, tpu.core_type = #tpu.core_type<tc>, window_params = [{transform_indices = @transform_0, window_bounds = array<i64: 1, 4, 2, 128>}, {transform_indices = @transform_1, window_bounds = array<i64: 1, 1, 2, 128>}, {transform_indices = @transform_2, window_bounds = array<i64: 1, 1, 2, 128>}]} {
    %c0_i32 = arith.constant 0 : i32
    %0 = arith.cmpi eq, %arg2, %c0_i32 : i32
    %1 = arith.extui %0 : i1 to i32
    %c0_i32_0 = arith.constant 0 : i32
    %2 = arith.cmpi ne, %1, %c0_i32_0 : i32
    scf.if %2 {
      %cst_23 = arith.constant 0.000000e+00 : f32
      %59 = vector.broadcast %cst_23 : f32 to vector<1x1x2x128xf32>
      %c0_24 = arith.constant 0 : index
      %c0_25 = arith.constant 0 : index
      %c0_26 = arith.constant 0 : index
      %c0_27 = arith.constant 0 : index
      %60 = vector.load %arg5[%c0_24, %c0_25, %c0_26, %c0_27] : memref<1x1x2x128xf32, #tpu.memory_space<vmem>>, vector<1x1x2x128xf32>
      tpu.vector_store %arg5[%c0_24, %c0_25, %c0_26, %c0_27], %59 {strides = array<i32>} : memref<1x1x2x128xf32, #tpu.memory_space<vmem>>, vector<1x1x2x128xf32>,
    } else {
    }
    %c0 = arith.constant 0 : index
    %c0_1 = arith.constant 0 : index
    %c0_2 = arith.constant 0 : index
    %c0_3 = arith.constant 0 : index
    %3 = vector.load %arg3[%c0, %c0_1, %c0_2, %c0_3] : memref<1x4x2x128xf32, #tpu.memory_space<vmem>>, vector<1x4x2x128xf32>
    %c0_4 = arith.constant 0 : index
    %c0_5 = arith.constant 0 : index
    %c0_6 = arith.constant 0 : index
    %c0_7 = arith.constant 0 : index
    %4 = vector.load %arg4[%c0_4, %c0_5, %c0_6, %c0_7] : memref<1x1x2x128xi32, #tpu.memory_space<vmem>>, vector<1x1x2x128xi32>
    %cst = arith.constant dense<0xFF800000> : vector<1x2x128xf32>
    %5 = vector.multi_reduction <maximumf>, %3, %cst [1] : vector<1x4x2x128xf32> to vector<1x2x128xf32>
    %6 = vector.shape_cast %5 : vector<1x2x128xf32> to vector<1x1x2x128xf32>
    %7 = vector.broadcast %6 : vector<1x1x2x128xf32> to vector<1x4x2x128xf32>
    %8 = arith.subf %3, %7 : vector<1x4x2x128xf32>
    %9 = math.exp %8 : vector<1x4x2x128xf32>
    %cst_8 = arith.constant dense<0.000000e+00> : vector<1x2x128xf32>
    %10 = vector.multi_reduction <add>, %9, %cst_8 [1] : vector<1x4x2x128xf32> to vector<1x2x128xf32>
    %11 = vector.shape_cast %10 : vector<1x2x128xf32> to vector<1x1x2x128xf32>
    %12 = math.log %11 : vector<1x1x2x128xf32>
    %cst_9 = arith.constant 0.000000e+00 : f32
    %13 = vector.broadcast %cst_9 : f32 to vector<1x1x2x128xf32>
    %c0_i32_10 = arith.constant 0 : i32
    %14 = vector.broadcast %c0_i32_10 : i32 to vector<1x1x2x128xi32>
    %15 = arith.cmpi eq, %4, %14 : vector<1x1x2x128xi32>
    %16 = vector.extract_strided_slice %8 {offsets = [0, 0, 0, 0], sizes = [1, 1, 2, 128], strides = [1, 1, 1, 1]} : vector<1x4x2x128xf32> to vector<1x1x2x128xf32>
    %cst_11 = arith.constant 0.000000e+00 : f32
    %17 = vector.broadcast %cst_11 : f32 to vector<1x1x2x128xf32>
    %18 = arith.select %15, %16, %17 : vector<1x1x2x128xi1>, vector<1x1x2x128xf32>
    %19 = arith.addf %13, %18 : vector<1x1x2x128xf32>
    %c1_i32 = arith.constant 1 : i32
    %20 = vector.broadcast %c1_i32 : i32 to vector<1x1x2x128xi32>
    %21 = arith.cmpi eq, %4, %20 : vector<1x1x2x128xi32>
    %22 = vector.extract_strided_slice %8 {offsets = [0, 1, 0, 0], sizes = [1, 1, 2, 128], strides = [1, 1, 1, 1]} : vector<1x4x2x128xf32> to vector<1x1x2x128xf32>
    %cst_12 = arith.constant 0.000000e+00 : f32
    %23 = vector.broadcast %cst_12 : f32 to vector<1x1x2x128xf32>
    %24 = arith.select %21, %22, %23 : vector<1x1x2x128xi1>, vector<1x1x2x128xf32>
    %25 = arith.addf %19, %24 : vector<1x1x2x128xf32>
    %c2_i32 = arith.constant 2 : i32
    %26 = vector.broadcast %c2_i32 : i32 to vector<1x1x2x128xi32>
    %27 = arith.cmpi eq, %4, %26 : vector<1x1x2x128xi32>
    %28 = vector.extract_strided_slice %8 {offsets = [0, 2, 0, 0], sizes = [1, 1, 2, 128], strides = [1, 1, 1, 1]} : vector<1x4x2x128xf32> to vector<1x1x2x128xf32>
    %cst_13 = arith.constant 0.000000e+00 : f32
    %29 = vector.broadcast %cst_13 : f32 to vector<1x1x2x128xf32>
    %30 = arith.select %27, %28, %29 : vector<1x1x2x128xi1>, vector<1x1x2x128xf32>
    %31 = arith.addf %25, %30 : vector<1x1x2x128xf32>
    %c3_i32 = arith.constant 3 : i32
    %32 = vector.broadcast %c3_i32 : i32 to vector<1x1x2x128xi32>
    %33 = arith.cmpi eq, %4, %32 : vector<1x1x2x128xi32>
    %34 = vector.extract_strided_slice %8 {offsets = [0, 3, 0, 0], sizes = [1, 1, 2, 128], strides = [1, 1, 1, 1]} : vector<1x4x2x128xf32> to vector<1x1x2x128xf32>
    %cst_14 = arith.constant 0.000000e+00 : f32
    %35 = vector.broadcast %cst_14 : f32 to vector<1x1x2x128xf32>
    %36 = arith.select %33, %34, %35 : vector<1x1x2x128xi1>, vector<1x1x2x128xf32>
    %37 = arith.addf %31, %36 : vector<1x1x2x128xf32>
    %38 = arith.subf %37, %12 : vector<1x1x2x128xf32>
    %39 = math.exp %38 : vector<1x1x2x128xf32>
    %cst_15 = arith.constant 1.000000e+00 : f32
    %40 = vector.broadcast %cst_15 : f32 to vector<1x1x2x128xf32>
    %41 = arith.subf %40, %39 : vector<1x1x2x128xf32>
    %cst_16 = arith.constant 0.000000e+00 : f32
    %42 = vector.broadcast %cst_16 : f32 to vector<1x1x2x128xf32>
    %43 = arith.maximumf %41, %42 : vector<1x1x2x128xf32>
    %44 = arith.mulf %43, %43 : vector<1x1x2x128xf32>
    %cst_17 = arith.constant 0.000000e+00 : f32
    %45 = vector.broadcast %cst_17 : f32 to vector<1x1x2x128xf32>
    %46 = arith.subf %45, %44 : vector<1x1x2x128xf32>
    %47 = arith.mulf %46, %38 : vector<1x1x2x128xf32>
    %c1_i32_18 = arith.constant 1 : i32
    %48 = arith.muli %arg1, %c1_i32_18 : i32
    %49 = arith.addi %48, %arg2 : i32
    %c2_i32_19 = arith.constant 2 : i32
    %50 = arith.muli %49, %c2_i32_19 : i32
    %c128_i32 = arith.constant 128 : i32
    %51 = arith.muli %50, %c128_i32 : i32
    %c256_i32 = arith.constant 256 : i32
    %52 = arith.addi %51, %c256_i32 : i32
    %c256_i32_20 = arith.constant 256 : i32
    %53 = arith.cmpi sle, %52, %c256_i32_20 : i32
    %54 = arith.extui %53 : i1 to i32
    %c0_i32_21 = arith.constant 0 : i32
    %55 = arith.cmpi ne, %54, %c0_i32_21 : i32
    scf.if %55 {
      %c0_23 = arith.constant 0 : index
      %c0_24 = arith.constant 0 : index
      %c0_25 = arith.constant 0 : index
      %c0_26 = arith.constant 0 : index
      %59 = vector.load %arg5[%c0_23, %c0_24, %c0_25, %c0_26] : memref<1x1x2x128xf32, #tpu.memory_space<vmem>>, vector<1x1x2x128xf32>
      %60 = arith.addf %59, %47 : vector<1x1x2x128xf32>
      %c0_27 = arith.constant 0 : index
      %c0_28 = arith.constant 0 : index
      %c0_29 = arith.constant 0 : index
      %c0_30 = arith.constant 0 : index
      %61 = vector.load %arg5[%c0_27, %c0_28, %c0_29, %c0_30] : memref<1x1x2x128xf32, #tpu.memory_space<vmem>>, vector<1x1x2x128xf32>
      tpu.vector_store %arg5[%c0_27, %c0_28, %c0_29, %c0_30], %60 {strides = array<i32>} : memref<1x1x2x128xf32, #tpu.memory_space<vmem>>, vector<1x1x2x128xf32>,
    } else {
    }
    %true = arith.constant true
    %56 = arith.xori %53, %true : i1
    %57 = arith.extui %56 : i1 to i32
    %c0_i32_22 = arith.constant 0 : i32
    %58 = arith.cmpi ne, %57, %c0_i32_22 : i32
    scf.if %58 {
      %59 = tpu.iota {dimensions = array<i32: 2>} : vector<1x1x2x128xi32>
      %60 = tpu.iota {dimensions = array<i32: 3>} : vector<1x1x2x128xi32>
      %c128_i32_23 = arith.constant 128 : i32
      %61 = vector.broadcast %c128_i32_23 : i32 to vector<1x1x2x128xi32>
      %62 = arith.muli %59, %61 : vector<1x1x2x128xi32>
      %63 = vector.broadcast %51 : i32 to vector<1x1x2x128xi32>
      %64 = arith.addi %63, %62 : vector<1x1x2x128xi32>
      %65 = arith.addi %64, %60 : vector<1x1x2x128xi32>
      %c256_i32_24 = arith.constant 256 : i32
      %66 = vector.broadcast %c256_i32_24 : i32 to vector<1x1x2x128xi32>
      %67 = arith.cmpi slt, %65, %66 : vector<1x1x2x128xi32>
      %c0_25 = arith.constant 0 : index
      %c0_26 = arith.constant 0 : index
      %c0_27 = arith.constant 0 : index
      %c0_28 = arith.constant 0 : index
      %68 = vector.load %arg5[%c0_25, %c0_26, %c0_27, %c0_28] : memref<1x1x2x128xf32, #tpu.memory_space<vmem>>, vector<1x1x2x128xf32>
      %cst_29 = arith.constant 0.000000e+00 : f32
      %69 = vector.broadcast %cst_29 : f32 to vector<1x1x2x128xf32>
      %70 = arith.select %67, %47, %69 : vector<1x1x2x128xi1>, vector<1x1x2x128xf32>
      %71 = arith.addf %68, %70 : vector<1x1x2x128xf32>
      %c0_30 = arith.constant 0 : index
      %c0_31 = arith.constant 0 : index
      %c0_32 = arith.constant 0 : index
      %c0_33 = arith.constant 0 : index
      %72 = vector.load %arg5[%c0_30, %c0_31, %c0_32, %c0_33] : memref<1x1x2x128xf32, #tpu.memory_space<vmem>>, vector<1x1x2x128xf32>
      tpu.vector_store %arg5[%c0_30, %c0_31, %c0_32, %c0_33], %71 {strides = array<i32>} : memref<1x1x2x128xf32, #tpu.memory_space<vmem>>, vector<1x1x2x128xf32>,
    } else {
    }
    return
  }
  func.func @transform_0(%arg0: i32, %arg1: i32, %arg2: i32) -> (i32, i32, i32, i32) {
    %c1_i32 = arith.constant 1 : i32
    %0 = arith.muli %arg1, %c1_i32 : i32
    %1 = arith.addi %0, %arg2 : i32
    %c0_i32 = arith.constant 0 : i32
    %2 = arith.minsi %1, %c0_i32 : i32
    %c0_i32_0 = arith.constant 0 : i32
    %c0_i32_1 = arith.constant 0 : i32
    %c0_i32_2 = arith.constant 0 : i32
    return %arg0, %c0_i32_0, %2, %c0_i32_1 : i32, i32, i32, i32
  }
  func.func @transform_1(%arg0: i32, %arg1: i32, %arg2: i32) -> (i32, i32, i32, i32) {
    %c1_i32 = arith.constant 1 : i32
    %0 = arith.muli %arg1, %c1_i32 : i32
    %1 = arith.addi %0, %arg2 : i32
    %c0_i32 = arith.constant 0 : i32
    %2 = arith.minsi %1, %c0_i32 : i32
    %c0_i32_0 = arith.constant 0 : i32
    %c0_i32_1 = arith.constant 0 : i32
    %c0_i32_2 = arith.constant 0 : i32
    return %arg0, %c0_i32_0, %2, %c0_i32_1 : i32, i32, i32, i32
  }
  func.func @transform_2(%arg0: i32, %arg1: i32, %arg2: i32) -> (i32, i32, i32, i32) {
    %c0_i32 = arith.constant 0 : i32
    %c0_i32_0 = arith.constant 0 : i32
    %c0_i32_1 = arith.constant 0 : i32
    return %arg0, %arg1, %c0_i32, %c0_i32_0 : i32, i32, i32, i32
  }
}

</mosaic_0001>

<llo_original>
// kernel: tpu_custom_call.1
$region0: #{tpu_custom_call.1}
  #allocation0 [shape = 'u32[]', space=smem, size = 0x4, offset = 0x4, fixed_abs, tag = 'smem constant byte address 0x4 - core index']
  #allocation1 [shape = 'u32[72,128]{1,0:T(1,128)}', space=vmem, size = 0x9000, scoped, tag = 'internal scratch']
  %s0 = inlined_call_operand.hbm [shape: f32[2,4,2,128], index: 0, kind: input, shape index: {}]
  %s1 = inlined_call_operand.hbm [shape: s32[2,1,2,128], index: 1, kind: input, shape index: {}]
  %s2 = inlined_call_operand.hbm [shape: f32[2,1,2,128], index: 2, kind: output, shape index: {}]
  %s3 = sld [smem:[#allocation0]]
  $region61: #{tpu_custom_call.1} parent=0
    _
  %s5 = ssub.s32 1, %s3
  %s6 = scalar_select 0, %s5, %s3
  $region1: #{tpu_custom_call.1} parent=0
    #allocation2 [shape = 'u8[8192]{0}', space=vmem, size = 0x2000, scoped, tag = 'input window, operand 0']
    #allocation3 [shape = 's32[2]{0}', space=sflag, size = 0x8, scoped, tag = 'scoped memory for tpu_custom_call.1']
    #allocation4 [shape = 's32[2]{0}', space=sflag, size = 0x8, scoped, tag = 'scoped memory for tpu_custom_call.1']
    #allocation5 [shape = 'u8[2048]{0}', space=vmem, size = 0x800, scoped, tag = 'input window, operand 1']
    #allocation6 [shape = 's32[2]{0}', space=sflag, size = 0x8, scoped, tag = 'scoped memory for tpu_custom_call.1']
    #allocation7 [shape = 'u8[2048]{0}', space=vmem, size = 0x800, scoped, tag = 'output window, operand 0']
    %7 = vsyncpa [#allocation3], 0
    %s8 = scalar_lea.sflag [#allocation3], 1
    %9 = vsyncpa %s8, 0
    %10 = vsyncpa [#allocation6], 0
    %s11 = scalar_lea.sflag [#allocation6], 1
    %12 = vsyncpa %s11, 0
    %13 = vsyncpa [#allocation4], 0
    %s14 = scalar_lea.sflag [#allocation4], 1
    %15 = vsyncpa %s14, 0
    loop: start=0, step=1, limit=4
    $region2: #{tpu_custom_call.1} parent=1 // loop_pre_header
      _
    $region3: #{tpu_custom_call.1} parent=1 // loop_header
      %s17 = sphi 0, %s21
      %p18 = scmp.ge.s32.totalorder %s17, 4
      %s24 = sphi 0, %s43
      %s25 = sphi 0, %s39
      %s26 = sphi 0, %s35
      %s27 = sphi 0, %s24
      %s28 = sphi 0, %s25
      %s29 = sphi 0, %s26
      %s30 = sphi 0, %s27
      %s31 = sphi 0, %s28
      %s32 = sphi 0, %s29
      %s54 = sphi 0, %s56
      %s57 = sphi 0, %s54
      %s58 = sphi 0, %s57
      %s74 = sphi 0, %s58
      %s88 = sphi 0, %s90
      %s91 = sphi 0, %s88
      %s92 = sphi 0, %s91
      %s108 = sphi 0, %s92
      %s116 = sphi 0, %s118
      %s119 = sphi 0, %s116
      %s120 = sphi 0, %s119
      %s136 = sphi 0, %s120
    $region4: #{tpu_custom_call.1} parent=1 // loop_header_branch
      %20 = sbr.rel (%p18) target = $region8
    $region5: #{tpu_custom_call.1} parent=1 // loop_body
      %s22 = ssub.s32 %s17, 1
      %s23 = ssub.s32 %s17, 2
      %s33 = sadd.s32 1, %s26
      %p34 = scmp.ge.s32.totalorder %s33, 1
      %s35 = scalar_select %p34, 0, %s33
      %s36 = sadd.s32 1, %s25
      %s37 = scalar_select %p34, %s36, %s25
      %p38 = scmp.ge.s32.totalorder %s37, 1
      %s39 = scalar_select %p38, 0, %s37
      %s40 = sadd.s32 1, %s24
      %s41 = scalar_select %p38, %s40, %s24
      %p42 = scmp.ge.s32.totalorder %s41, 2
      %s43 = scalar_select %p42, 0, %s41
      %s44 = sadd.s32 %s25, %s26
      %p45 = scmp.lt.s32.totalorder %s44, 0
      %s46 = scalar_select %p45, %s44, 0
      %s47 = sadd.s32 %s39, %s35
      %p48 = scmp.lt.s32.totalorder %s47, 0
      %s49 = scalar_select %p48, %s47, 0
      %s50 = ssub.s32 %s24, %s43
      %s51 = ssub.s32 %s46, %s49
      %s52 = sor.u32 %s50, %s51
      %p53 = scmp.eq.s32.totalorder %s52, 0
      %s55 = sadd.s32 %s54, 1
      %s56 = scalar_select %p53, %s54, %s55
      %p59 = pneg %p53
      %p60 = scmp.eq.s32.totalorder %s17, 1
      %p61 = por %p59, %p60
      %p62 = scmp.ne.s32.totalorder %s54, %s57
      %p63 = scmp.eq.s32.totalorder %s17, 0
      %p64 = por %p62, %p63
      %p65 = scmp.ne.s32.totalorder %s54, %s57
      %p66 = scmp.eq.s32.totalorder %s22, 1
      %p67 = por %p65, %p66
      %p68 = scmp.ne.s32.totalorder %s57, %s58
      %p69 = scmp.eq.s32.totalorder %s22, 0
      %p70 = por %p68, %p69
      %p71 = scmp.ne.s32.totalorder %s57, %s58
      %p72 = scmp.eq.s32.totalorder %s23, 1
      %p73 = por %p71, %p72
      %p75 = scmp.ne.s32.totalorder %s58, %s74
      %p76 = scmp.eq.s32.totalorder %s23, 0
      %p77 = por %p75, %p76
      %s78 = sadd.s32 %s25, %s26
      %p79 = scmp.lt.s32.totalorder %s78, 0
      %s80 = scalar_select %p79, %s78, 0
      %s81 = sadd.s32 %s39, %s35
      %p82 = scmp.lt.s32.totalorder %s81, 0
      %s83 = scalar_select %p82, %s81, 0
      %s84 = ssub.s32 %s24, %s43
      %s85 = ssub.s32 %s80, %s83
      %s86 = sor.u32 %s84, %s85
      %p87 = scmp.eq.s32.totalorder %s86, 0
      %s89 = sadd.s32 %s88, 1
      %s90 = scalar_select %p87, %s88, %s89
      %p93 = pneg %p87
      %p94 = scmp.eq.s32.totalorder %s17, 1
      %p95 = por %p93, %p94
      %p96 = scmp.ne.s32.totalorder %s88, %s91
      %p97 = scmp.eq.s32.totalorder %s17, 0
      %p98 = por %p96, %p97
      %p99 = scmp.ne.s32.totalorder %s88, %s91
      %p100 = scmp.eq.s32.totalorder %s22, 1
      %p101 = por %p99, %p100
      %p102 = scmp.ne.s32.totalorder %s91, %s92
      %p103 = scmp.eq.s32.totalorder %s22, 0
      %p104 = por %p102, %p103
      %p105 = scmp.ne.s32.totalorder %s91, %s92
      %p106 = scmp.eq.s32.totalorder %s23, 1
      %p107 = por %p105, %p106
      %p109 = scmp.ne.s32.totalorder %s92, %s108
      %p110 = scmp.eq.s32.totalorder %s23, 0
      %p111 = por %p109, %p110
      %s112 = ssub.s32 %s24, %s43
      %s113 = ssub.s32 %s25, %s39
      %s114 = sor.u32 %s112, %s113
      %p115 = scmp.eq.s32.totalorder %s114, 0
      %s117 = sadd.s32 %s116, 1
      %s118 = scalar_select %p115, %s116, %s117
      %p121 = pneg %p115
      %p122 = scmp.eq.s32.totalorder %s17, 1
      %p123 = por %p121, %p122
      %p124 = scmp.ne.s32.totalorder %s116, %s119
      %p125 = scmp.eq.s32.totalorder %s17, 0
      %p126 = por %p124, %p125
      %p127 = scmp.ne.s32.totalorder %s116, %s119
      %p128 = scmp.eq.s32.totalorder %s22, 1
      %p129 = por %p127, %p128
      %p130 = scmp.ne.s32.totalorder %s119, %s120
      %p131 = scmp.eq.s32.totalorder %s22, 0
      %p132 = por %p130, %p131
      %p133 = scmp.ne.s32.totalorder %s119, %s120
      %p134 = scmp.eq.s32.totalorder %s23, 1
      %p135 = por %p133, %p134
      %p137 = scmp.ne.s32.totalorder %s120, %s136
      %p138 = scmp.eq.s32.totalorder %s23, 0
      %p139 = por %p137, %p138
      %p140 = scmp.le.s32.totalorder 1, %s17
      %p141 = scmp.lt.s32.totalorder %s17, 3
      %p142 = pnand %p140, %p141
      %p143 = pneg %p142
      // Predicated region
      $region9: #{tpu_custom_call.1} parent=5 // pred_check
        _
      $region10: #{tpu_custom_call.1} parent=5 // pred_check_branch
        %145 = sbr.rel (%p142) target = $region12
      $region11: #{tpu_custom_call.1} parent=5 // pred_region
        %s146 = ssub.s32 %s17, 1
      $region12: #{tpu_custom_call.1} parent=5 // pred_fallthru
        _
      %p147 = scmp.lt.s32.totalorder %s17, 2
      // Predicated region
      $region13: #{tpu_custom_call.1} parent=5 // pred_check
        %p148 = pneg %p147
      $region14: #{tpu_custom_call.1} parent=5 // pred_check_branch
        %150 = sbr.rel (%p148) target = $region16
      $region15: #{tpu_custom_call.1} parent=5 // pred_region
        // Predicated region
        $region17: #{tpu_custom_call.1} parent=15 // pred_check
          %p151 = pneg %p64
        $region18: #{tpu_custom_call.1} parent=15 // pred_check_branch
          %153 = sbr.rel (%p151) target = $region20
        $region19: #{tpu_custom_call.1} parent=15 // pred_region
          %s154 = sand.u32 %s54, 1
          %s155 = scalar_lea.sflag [#allocation3], %s154
          %s156 = sand.u32 %s54, 1
          %s157 = smul.addr %s156, 8
          %s158 = scalar_lea.vmem [#allocation2], %s157
          %s159 = sadd.s32 %s25, %s26
          %p160 = scmp.lt.s32.totalorder %s159, 0
          %s161 = scalar_select %p160, %s159, 0
          %163 = vsyncadd %s155, 0
          %s164 = smul.addr %s24, 4
          %s165 = sadd.s32 %s161, %s164
          %s166 = smul.addr %s165, 2
          %s167 = scalar_lea.hbm %s0, %s166
          %s168 = sshll.u32 %s167, 4
          %s169 = int_to_ptr.hbm [resolvable:$true] %s168
          %s170 = sshll.u32 %s158, 4
          %s171 = int_to_ptr.vmem [resolvable:$true] %s170
          %176 = dma.hbm_to_vmem [thread:$0]  %s169, 128, %s171, %s155, 32, 32, 2
        $region20: #{tpu_custom_call.1} parent=15 // pred_fallthru
          _
        // Predicated region
        $region21: #{tpu_custom_call.1} parent=15 // pred_check
          %p177 = pneg %p98
        $region22: #{tpu_custom_call.1} parent=15 // pred_check_branch
          %179 = sbr.rel (%p177) target = $region24
        $region23: #{tpu_custom_call.1} parent=15 // pred_region
          %s180 = sand.u32 %s88, 1
          %s181 = scalar_lea.sflag [#allocation6], %s180
          %s182 = sand.u32 %s88, 1
          %s183 = smul.addr %s182, 2
          %s184 = scalar_lea.vmem [#allocation5], %s183
          %s185 = sadd.s32 %s25, %s26
          %p186 = scmp.lt.s32.totalorder %s185, 0
          %s187 = scalar_select %p186, %s185, 0
          %189 = vsyncadd %s181, 0
          %s190 = sadd.s32 %s187, %s24
          %s191 = smul.addr %s190, 2
          %s192 = scalar_lea.hbm %s1, %s191
          %s194 = sshll.u32 %s192, 4
          %s195 = int_to_ptr.hbm [resolvable:$true] %s194
          %s196 = sshll.u32 %s184, 4
          %s197 = int_to_ptr.vmem [resolvable:$true] %s196
          %199 = dma.hbm_to_vmem [thread:$0]  %s195, 32, %s197, %s181
        $region24: #{tpu_custom_call.1} parent=15 // pred_fallthru
          _
      $region16: #{tpu_custom_call.1} parent=5 // pred_fallthru
        _
      %p200 = scmp.le.s32.totalorder 1, %s17
      %p201 = scmp.lt.s32.totalorder %s17, 3
      %p202 = pnand %p200, %p201
      %p203 = pneg %p202
      // Predicated region
      $region25: #{tpu_custom_call.1} parent=5 // pred_check
        _
      $region26: #{tpu_custom_call.1} parent=5 // pred_check_branch
        %205 = sbr.rel (%p202) target = $region28
      $region27: #{tpu_custom_call.1} parent=5 // pred_region
        %s206 = ssub.s32 %s17, 1
        %s207 = sand.u32 %s57, 1
        %s208 = scalar_lea.sflag [#allocation3], %s207
        %s209 = sand.u32 %s57, 1
        %s210 = smul.addr %s209, 8
        %s211 = scalar_lea.vmem [#allocation2], %s210
        // Predicated region
        $region29: #{tpu_custom_call.1} parent=27 // pred_check
          %p212 = pneg %p70
        $region30: #{tpu_custom_call.1} parent=27 // pred_check_branch
          %214 = sbr.rel (%p212) target = $region32
        $region31: #{tpu_custom_call.1} parent=27 // pred_region
          %216 = dma.done %s208, 128
        $region32: #{tpu_custom_call.1} parent=27 // pred_fallthru
          _
        %s217 = sand.u32 %s91, 1
        %s218 = scalar_lea.sflag [#allocation6], %s217
        %s219 = sand.u32 %s91, 1
        %s220 = smul.addr %s219, 2
        %s221 = scalar_lea.vmem [#allocation5], %s220
        // Predicated region
        $region33: #{tpu_custom_call.1} parent=27 // pred_check
          %p222 = pneg %p104
        $region34: #{tpu_custom_call.1} parent=27 // pred_check_branch
          %224 = sbr.rel (%p222) target = $region36
        $region35: #{tpu_custom_call.1} parent=27 // pred_region
          %226 = dma.done %s218, 32
        $region36: #{tpu_custom_call.1} parent=27 // pred_fallthru
          _
        %s227 = sand.u32 %s57, 1
        %s228 = scalar_lea.sflag [#allocation3], %s227
        %s229 = sand.u32 %s57, 1
        %s230 = smul.addr %s229, 8
        %s231 = scalar_lea.vmem [#allocation2], %s230
        %p232 = pneg %p70
        %p233 = pneg %p67
        %s234 = sand.u32 %s91, 1
        %s235 = scalar_lea.sflag [#allocation6], %s234
        %s236 = sand.u32 %s91, 1
        %s237 = smul.addr %s236, 2
        %s238 = scalar_lea.vmem [#allocation5], %s237
        %p239 = pneg %p104
        %p240 = pneg %p101
        %p241 = pneg %p132
        %p242 = pneg %p129
        %s243 = sand.u32 %s119, 1
        %s244 = scalar_lea.sflag [#allocation4], %s243
        %s245 = sand.u32 %s119, 1
        %s246 = smul.addr %s245, 2
        %s247 = scalar_lea.vmem [#allocation7], %s246
        %s248 = sadd.s32 %s28, %s29
        %p249 = scmp.lt.s32.totalorder %s248, 0
        %s250 = scalar_select %p249, %s248, 0
        %s251 = sadd.s32 %s28, %s29
        %p252 = scmp.lt.s32.totalorder %s251, 0
        %s253 = scalar_select %p252, %s251, 0
        %p254 = scmp.eq.s32.totalorder %s29, 0
        // Predicated region
        $region37: #{tpu_custom_call.1} parent=27 // pred_check
          %p255 = pneg %p254
        $region38: #{tpu_custom_call.1} parent=27 // pred_check_branch
          %257 = sbr.rel (%p255) target = $region40
        $region39: #{tpu_custom_call.1} parent=27 // pred_region
          %258 = vst [vmem:[%s247] sm:$0x3] 0.0
        $region40: #{tpu_custom_call.1} parent=27 // pred_fallthru
          _
        %v259 = vld [vmem:[%s211] sm:$0x3]
        %v260 = vld [vmem:[%s211 + $0x2] sm:$0x3]
        %v261 = vld [vmem:[%s211 + $0x4] sm:$0x3]
        %v262 = vld [vmem:[%s211 + $0x6] sm:$0x3]
        %v263 = vld [vmem:[%s221] sm:$0x3]
        %vm264 = vcmask 1041408
        %v265 = vsel %vm264, %v259, -inf
        %v266 = vsel %vm264, %v260, -inf
        %v267 = vsel %vm264, %v261, -inf
        %v268 = vsel %vm264, %v262, -inf
        %v269 = vmax.f32 %v265, %v266
        %v270 = vmax.f32 %v267, %v268
        %v271 = vmax.f32 %v269, %v270
        %v272 = vsub.f32 %v259, %v271
        %v273 = vsub.f32 %v260, %v271
        %v274 = vsub.f32 %v261, %v271
        %v275 = vsub.f32 %v262, %v271
        %v276 = vmul.f32 %v272, 1.442695
        %v277 = vpow.pop %v276
        %v278 = vmul.f32 %v273, 1.442695
        %v279 = vpow.pop %v278
        %v280 = vmul.f32 %v274, 1.442695
        %v281 = vpow.pop %v280
        %v282 = vmul.f32 %v275, 1.442695
        %v283 = vpow.pop %v282
        %v284 = vsel %vm264, %v277, 0.0
        %v285 = vsel %vm264, %v279, 0.0
        %v286 = vadd.f32 %v284, %v285
        %v287 = vsel %vm264, %v281, 0.0
        %v288 = vadd.f32 %v286, %v287
        %v289 = vsel %vm264, %v283, 0.0
        %v290 = vadd.f32 %v288, %v289
        %v291 = vlog2.pop %v290
        %v292 = vmul.f32 %v291, 0.6931472
        %vm293 = vcmp.eq.s32.totalorder %v263, 0
        %v294 = vsel %vm293, %v272, 0.0
        %v295 = vadd.f32 %v294, 0.0
        %vm296 = vcmp.eq.s32.totalorder %v263, 1
        %v297 = vsel %vm296, %v273, 0.0
        %v298 = vadd.f32 %v295, %v297
        %vm299 = vcmp.eq.s32.totalorder %v263, 2
        %v300 = vsel %vm299, %v274, 0.0
        %v301 = vadd.f32 %v298, %v300
        %vm302 = vcmp.eq.s32.totalorder %v263, 3
        %v303 = vsel %vm302, %v275, 0.0
        %v304 = vadd.f32 %v301, %v303
        %v305 = vsub.f32 %v304, %v292
        %v306 = vmul.f32 %v305, 1.442695
        %v307 = vpow.pop %v306
        %v308 = vsub.f32 1.0, %v307
        %v309 = vmax.f32 %v308, 0.0
        %v310 = vmul.f32 %v309, %v309
        %v311 = vsub.f32 0.0, %v310
        %v312 = vmul.f32 %v311, %v305
        %s313 = sadd.s32 %s28, %s29
        %s314 = smul.u32 %s313, 256
        %s315 = sadd.s32 %s314, 256
        %p316 = scmp.le.s32.totalorder %s315, 256
        // Predicated region
        $region41: #{tpu_custom_call.1} parent=27 // pred_check
          %p317 = pneg %p316
        $region42: #{tpu_custom_call.1} parent=27 // pred_check_branch
          %319 = sbr.rel (%p317) target = $region44
        $region43: #{tpu_custom_call.1} parent=27 // pred_region
          %v320 = vld [vmem:[%s247] sm:$0x3]
          %v321 = vadd.f32 %v320, %v312
          %322 = vst [vmem:[%s247] sm:$0x3] %v321
        $region44: #{tpu_custom_call.1} parent=27 // pred_fallthru
          _
        %p323 = scmp.gt.s32.totalorder %s315, 256
        // Predicated region
        $region45: #{tpu_custom_call.1} parent=27 // pred_check
          %p324 = pneg %p323
        $region46: #{tpu_custom_call.1} parent=27 // pred_check_branch
          %326 = sbr.rel (%p324) target = $region48
        $region47: #{tpu_custom_call.1} parent=27 // pred_region
          %v327 = vlaneseq
          %v328 = vshrl.u32 %v327, 7
          %v329 = vlaneseq
          %v330 = vand.u32 %v329, 127
          %v331 = vmul.u32 %v328, 128
          %v332 = vstv %s314
          %v333 = vadd.s32 %v332, %v331
          %v334 = vadd.s32 %v333, %v330
          %vm335 = vcmp.lt.s32.totalorder %v334, 256
          %v336 = vld [vmem:[%s247] sm:$0x3]
          %v337 = vsel %vm335, %v312, 0.0
          %v338 = vadd.f32 %v336, %v337
          %339 = vst [vmem:[%s247] sm:$0x3] %v338
        $region48: #{tpu_custom_call.1} parent=27 // pred_fallthru
          _
        %s340 = sand.u32 %s119, 1
        %s341 = scalar_lea.sflag [#allocation4], %s340
        %s342 = sand.u32 %s119, 1
        %s343 = smul.addr %s342, 2
        %s344 = scalar_lea.vmem [#allocation7], %s343
        // Predicated region
        $region49: #{tpu_custom_call.1} parent=27 // pred_check
          %p345 = pneg %p129
        $region50: #{tpu_custom_call.1} parent=27 // pred_check_branch
          %347 = sbr.rel (%p345) target = $region52
        $region51: #{tpu_custom_call.1} parent=27 // pred_region
          %349 = vsyncadd %s341, 0
          %s350 = sadd.s32 %s28, %s27
          %s351 = smul.addr %s350, 2
          %s352 = scalar_lea.hbm %s2, %s351
          %s354 = sshll.u32 %s344, 4
          %s355 = int_to_ptr.vmem [resolvable:$true] %s354
          %s356 = sshll.u32 %s352, 4
          %s357 = int_to_ptr.hbm [resolvable:$true] %s356
          %359 = dma.vmem_to_hbm [thread:$0]  %s355, 32, %s357, %s341
        $region52: #{tpu_custom_call.1} parent=27 // pred_fallthru
          _
      $region28: #{tpu_custom_call.1} parent=5 // pred_fallthru
        _
      %p360 = scmp.le.s32.totalorder 2, %s17
      // Predicated region
      $region53: #{tpu_custom_call.1} parent=5 // pred_check
        %p361 = pneg %p360
      $region54: #{tpu_custom_call.1} parent=5 // pred_check_branch
        %363 = sbr.rel (%p361) target = $region56
      $region55: #{tpu_custom_call.1} parent=5 // pred_region
        %s364 = ssub.s32 %s17, 2
        // Predicated region
        $region57: #{tpu_custom_call.1} parent=55 // pred_check
          %p365 = pneg %p135
        $region58: #{tpu_custom_call.1} parent=55 // pred_check_branch
          %367 = sbr.rel (%p365) target = $region60
        $region59: #{tpu_custom_call.1} parent=55 // pred_region
          %s368 = sand.u32 %s120, 1
          %s369 = scalar_lea.sflag [#allocation4], %s368
          %s370 = sand.u32 %s120, 1
          %s371 = smul.addr %s370, 2
          %s372 = scalar_lea.vmem [#allocation7], %s371
          %374 = dma.done %s369, 32
        $region60: #{tpu_custom_call.1} parent=55 // pred_fallthru
          _
      $region56: #{tpu_custom_call.1} parent=5 // pred_fallthru
        _
    $region6: #{tpu_custom_call.1} parent=1 // loop_footer
      %s21 = sadd.s32 1, %s17
    $region7: #{tpu_custom_call.1} parent=1 // loop_footer_branch
      %16 = sbr.rel target = $region3
    $region8: #{tpu_custom_call.1} parent=1 // loop_exit
      _
    %375 = vsyncpa [#allocation3], 1
    %s376 = scalar_lea.sflag [#allocation3], 1
    %377 = vsyncpa %s376, 1
    %378 = vsyncpa [#allocation6], 1
    %s379 = scalar_lea.sflag [#allocation6], 1
    %380 = vsyncpa %s379, 1
    %381 = vsyncpa [#allocation4], 1
    %s382 = scalar_lea.sflag [#allocation4], 1
    %383 = vsyncpa %s382, 1

</llo_original>
